<compile_context>
chip_gen: v5e
topology: v5e:2x2
jax: 0.10.0
libtpu: 0.0.40
codegen_flags: <defaults>
</compile_context>

<pallas_src>
import jax
import jax.numpy as jnp
from jax.experimental import pallas as pl
from jax.experimental.pallas import tpu as pltpu


def _scale_kernel(s_ref, x_ref, o_ref):
    # s_ref: SMEM f32 scalar (shape (1,)); x_ref / o_ref: VMEM tiles.
    # Multiply promotes to f32 (scale is f32), then cast to the output dtype.
    o_ref[...] = (x_ref[...] * s_ref[0]).astype(o_ref.dtype)


_TARGET_TILE_ELEMS = 1536 * 1024   # ~6 MiB f32 / tile -> ~24 MiB double-buffered
_VMEM_LIMIT_BYTES = 48 << 20       # < v7x 64 MiB physical, << v5e/v6e 128 MiB


def _pick_lanes(total):
    """Largest lane-dense width that divides the flat size (no padding)."""
    for w in (1024, 512, 256, 128):
        if total % w == 0:
            return w
    return None


def _pick_tile_rows(rows, target_rows):
    if rows <= 8:
        return rows                       # tiny input: single block
    # Keep tr a multiple of 8 (sublane constraint) and ensure >= ~4 grid
    # steps so v7x's two TensorCores both get work and the DMA pipeline has
    # something to overlap; otherwise take the ~6 MiB target tile.
    return min(target_rows, max((rows // 4) // 8 * 8, 8))


def scale_forward(x: jax.Array, scale: jax.Array) -> jax.Array:
    """x: arbitrary-shaped array (e.g. NCHW). scale: shape (1,) float32."""
    orig_shape = x.shape
    # PyTorch semantics: x * FloatTensor([s]) promotes to result_type(x, f32).
    out_dtype = jnp.result_type(x.dtype, jnp.float32)
    total = x.size
    scale_f32 = scale.astype(jnp.float32).reshape(1)

    if total == 0:
        return jnp.zeros(orig_shape, out_dtype)

    lanes = _pick_lanes(total)
    if lanes is None:
        # Size not a multiple of 128: pad/slice/concat plumbing would add full
        # extra HBM passes to a bandwidth-bound op, so let XLA do one fused pass.
        return (x.astype(out_dtype) * scale_f32[0]).reshape(orig_shape)

    rows = total // lanes
    tr = _pick_tile_rows(rows, max(_TARGET_TILE_ELEMS // lanes, 8))
    grid = (pl.cdiv(rows, tr),)           # ragged last block: stores are masked

    x2d = x.reshape(rows, lanes)          # contiguous reshape: free (metadata)
    out_bytes = total * jnp.dtype(out_dtype).itemsize

    out2d = pl.pallas_call(
        _scale_kernel,
        out_shape=jax.ShapeDtypeStruct((rows, lanes), out_dtype),
        grid=grid,
        in_specs=[
            pl.BlockSpec(memory_space=pltpu.SMEM),         # scale (f32 scalar)
            pl.BlockSpec((tr, lanes), lambda i: (i, 0)),   # x tile
        ],
        out_specs=pl.BlockSpec((tr, lanes), lambda i: (i, 0)),
        compiler_params=pltpu.CompilerParams(
            dimension_semantics=("parallel",),
            vmem_limit_bytes=_VMEM_LIMIT_BYTES),
        cost_estimate=pl.CostEstimate(
            flops=total,
            transcendentals=0,
            bytes_accessed=x.nbytes + out_bytes),
    )(scale_f32, x2d)

    # No padding was added, so this reshape is free and exact.
    return out2d.reshape(orig_shape)


class ScalePallas:
    """JAX/Pallas port of the PyTorch Scale module."""

    def __init__(self, init_value: float = 1.0):
        # Same init as nn.Parameter(torch.FloatTensor([init_value]))
        self.scale = jnp.asarray([init_value], dtype=jnp.float32)

    def __call__(self, x):
        return scale_forward(x, self.scale)


if __name__ == "__main__":
    key = jax.random.PRNGKey(0)
    k1, k2 = jax.random.split(key)

    module = ScalePallas(init_value=1.0)
    module.scale = jnp.asarray([0.5], dtype=jnp.float32)  # non-trivial scale

    # 1) Small NCHW input (single-block path): 2*4*16*16 = 2048 elems.
    x = jax.random.normal(k1, (2, 4, 16, 16), dtype=jnp.float32)
    out = jax.block_until_ready(module(x))
    ref = x * module.scale[0]
    assert out.shape == ref.shape and out.dtype == ref.dtype
    assert jnp.allclose(out, ref, atol=0.0, rtol=0.0)

    # 2) Shape exercising the multi-step grid with a ragged last row block
    #    (20480 elems -> rows=20, tr=8, grid=3), still no padding.
    x2 = jax.random.normal(k2, (2, 4, 40, 64), dtype=jnp.float32)
    out2 = jax.block_until_ready(module(x2))
    ref2 = x2 * module.scale[0]
    assert out2.shape == ref2.shape and out2.dtype == ref2.dtype
    assert jnp.allclose(out2, ref2, atol=0.0, rtol=0.0)

    print("KERNEL_OK")
</pallas_src>

<mosaic_0001>
module attributes {stable_mosaic.version = 11 : i64} {
  func.func @_scale_kernel(%arg0: i32, %arg1: memref<1xf32, #tpu.memory_space<smem>>, %arg2: memref<2x1024xf32, #tpu.memory_space<vmem>>, %arg3: memref<2x1024xf32, #tpu.memory_space<vmem>>) attributes {dimension_semantics = [#tpu.dimension_semantics<parallel>], iteration_bounds = array<i64: 1>, scalar_prefetch = 0 : i64, scratch_operands = 0 : i64, tpu.core_type = #tpu.core_type<tc>, window_params = [{transform_indices = @transform_0, window_bounds = array<i64: 1>}, {transform_indices = @transform_1, window_bounds = array<i64: 2, 1024>}, {transform_indices = @transform_2, window_bounds = array<i64: 2, 1024>}]} {
    %c0 = arith.constant 0 : index
    %c0_0 = arith.constant 0 : index
    %0 = vector.load %arg2[%c0, %c0_0] : memref<2x1024xf32, #tpu.memory_space<vmem>>, vector<2x1024xf32>
    %c0_1 = arith.constant 0 : index
    %1 = memref.load %arg1[%c0_1] : memref<1xf32, #tpu.memory_space<smem>>
    %2 = vector.broadcast %1 : f32 to vector<2x1024xf32>
    %3 = arith.mulf %0, %2 : vector<2x1024xf32>
    %c0_2 = arith.constant 0 : index
    %c0_3 = arith.constant 0 : index
    %4 = vector.load %arg3[%c0_2, %c0_3] : memref<2x1024xf32, #tpu.memory_space<vmem>>, vector<2x1024xf32>
    tpu.vector_store %arg3[%c0_2, %c0_3], %3 {strides = array<i32>} : memref<2x1024xf32, #tpu.memory_space<vmem>>, vector<2x1024xf32>,
    return
  }
  func.func @transform_0(%arg0: i32) -> i32 {
    %c0_i32 = arith.constant 0 : i32
    %c0_i32_0 = arith.constant 0 : i32
    return %c0_i32 : i32
  }
  func.func @transform_1(%arg0: i32) -> (i32, i32) {
    %c0_i32 = arith.constant 0 : i32
    %c0_i32_0 = arith.constant 0 : i32
    return %arg0, %c0_i32 : i32, i32
  }
  func.func @transform_2(%arg0: i32) -> (i32, i32) {
    %c0_i32 = arith.constant 0 : i32
    %c0_i32_0 = arith.constant 0 : i32
    return %arg0, %c0_i32 : i32, i32
  }
}

</mosaic_0001>

<llo_original>
// kernel: tpu_custom_call.1
$region0: #{tpu_custom_call.1}
  #allocation0 [shape = 'u32[]', space=smem, size = 0x4, offset = 0x4, fixed_abs, tag = 'smem constant byte address 0x4 - core index']
  #allocation1 [shape = 'u32[72,128]{1,0:T(1,128)}', space=vmem, size = 0x9000, scoped, tag = 'internal scratch']
  #allocation2 [shape = 'f32[1]{0:T(128)S(6)}', space=smem, size = 0x200, scoped, tag = 'scoped memory for tpu_custom_call.1']
  %s0 = inlined_call_operand.<no memory space> [shape: f32[1], index: 0, kind: input, shape index: {}]
  %s1 = inlined_call_operand.hbm [shape: f32[2,1024], index: 1, kind: input, shape index: {}]
  %s2 = inlined_call_operand.hbm [shape: f32[2,1024], index: 2, kind: output, shape index: {}]
  %s3 = sld [smem:[#allocation0]]
  $region22: #{tpu_custom_call.1} parent=0
    _
  %s5 = ssub.s32 1, %s3
  %s6 = scalar_select 0, %s5, %s3
  %7 = sst [smem:[#allocation2]] %s0
  $region1: #{tpu_custom_call.1} parent=0
    #allocation3 [shape = 'u8[8192]{0}', space=vmem, size = 0x2000, scoped, tag = 'input window, operand 1, single buffered']
    #allocation4 [shape = 's32[1]{0}', space=sflag, size = 0x4, scoped, tag = 'scoped memory for tpu_custom_call.1']
    #allocation5 [shape = 's32[1]{0}', space=sflag, size = 0x4, scoped, tag = 'scoped memory for tpu_custom_call.1']
    #allocation6 [shape = 'u8[8192]{0}', space=vmem, size = 0x2000, scoped, tag = 'output window, operand 0, single buffered']
    %8 = vsyncpa [#allocation4], 0
    %9 = vsyncpa [#allocation5], 0
    // Predicated region
    $region2: #{tpu_custom_call.1} parent=1 // pred_check
      _
    $region3: #{tpu_custom_call.1} parent=1 // pred_check_branch
      %11 = sbr.rel (0) target = $region5
    $region4: #{tpu_custom_call.1} parent=1 // pred_region
      _
    $region5: #{tpu_custom_call.1} parent=1 // pred_fallthru
      _
    // Predicated region
    $region6: #{tpu_custom_call.1} parent=1 // pred_check
      _
    $region7: #{tpu_custom_call.1} parent=1 // pred_check_branch
      %13 = sbr.rel (0) target = $region9
    $region8: #{tpu_custom_call.1} parent=1 // pred_region
      %15 = vsyncadd [#allocation4], 0
      %s17 = sshll.u32 %s1, 4
      %s18 = int_to_ptr.hbm [resolvable:$true] %s17
      %s19 = sshll.u32 [#allocation3], 4
      %s20 = int_to_ptr.vmem [resolvable:$true] %s19
      %22 = dma.hbm_to_vmem [thread:$0]  %s18, 256, %s20, [#allocation4]
    $region9: #{tpu_custom_call.1} parent=1 // pred_fallthru
      _
    // Predicated region
    $region10: #{tpu_custom_call.1} parent=1 // pred_check
      _
    $region11: #{tpu_custom_call.1} parent=1 // pred_check_branch
      %24 = sbr.rel (0) target = $region13
    $region12: #{tpu_custom_call.1} parent=1 // pred_region
      %26 = dma.done [#allocation4], 256
    $region13: #{tpu_custom_call.1} parent=1 // pred_fallthru
      _
    %v27 = vld [vmem:[#allocation3] sm:$0xff]
    %v28 = vld [vmem:[#allocation3 + $0x8] sm:$0xff]
    %s29 = sld [smem:[#allocation2]]
    %v30 = vstv %s29
    %v31 = vmul.f32 %v27, %v30
    %v32 = vmul.f32 %v28, %v30
    %33 = vst [vmem:[#allocation6] sm:$0xff] %v31
    %34 = vst [vmem:[#allocation6 + $0x8] sm:$0xff] %v32
    // Predicated region
    $region14: #{tpu_custom_call.1} parent=1 // pred_check
      _
    $region15: #{tpu_custom_call.1} parent=1 // pred_check_branch
      %36 = sbr.rel (0) target = $region17
    $region16: #{tpu_custom_call.1} parent=1 // pred_region
      %38 = vsyncadd [#allocation5], 0
      %s40 = sshll.u32 [#allocation6], 4
      %s41 = int_to_ptr.vmem [resolvable:$true] %s40
      %s42 = sshll.u32 %s2, 4
      %s43 = int_to_ptr.hbm [resolvable:$true] %s42
      %45 = dma.vmem_to_hbm [thread:$0]  %s41, 256, %s43, [#allocation5]
    $region17: #{tpu_custom_call.1} parent=1 // pred_fallthru
      _
    // Predicated region
    $region18: #{tpu_custom_call.1} parent=1 // pred_check
      _
    $region19: #{tpu_custom_call.1} parent=1 // pred_check_branch
      %47 = sbr.rel (0) target = $region21
    $region20: #{tpu_custom_call.1} parent=1 // pred_region
      %49 = dma.done [#allocation5], 256
    $region21: #{tpu_custom_call.1} parent=1 // pred_fallthru
      _
    %50 = vsyncpa [#allocation4], 1
    %51 = vsyncpa [#allocation5], 1

</llo_original>
